<compile_context>
chip_gen: v5e
topology: v5e:2x2
jax: 0.10.0
libtpu: 0.0.40
codegen_flags: <defaults>
</compile_context>

<pallas_src>
import functools

import numpy as np
import jax
import jax.numpy as jnp
from jax.experimental import pallas as pl
from jax.experimental.pallas import tpu as pltpu


def _round_up(v, m):
    return ((v + m - 1) // m) * m


def _dwpw_conv_kernel(x_ref, wf_ref, bf_ref, o_ref, *, k, s, t_oh, w_out_pad,
                      c_in, h_ph):
    """Fused depthwise + 1x1 conv for one (batch, output-row-block) grid step.

    x_ref : (1, s*s*h_ph, w_ph, c_in)   phase-split padded image (resident per batch)
    wf_ref: (k*k, c_in, cpad)           fused depthwise x pointwise weights (resident)
    bf_ref: (1, cpad)                   fused bias, f32 (resident)
    o_ref : (1, t_oh, w_out_pad, cpad)  output tile (lane-dense channels)
    """
    cpad = o_ref.shape[-1]
    rows = t_oh * w_out_pad
    oh0 = pl.program_id(1) * t_oh          # first output row of this block

    acc = jnp.zeros((rows, cpad), jnp.float32)
    for kh in range(k):
        for kw in range(k):
            tap = kh * k + kw
            phase = (kh % s) * s + (kw % s)            # which stride phase
            row0 = phase * h_ph + (kh // s) + oh0      # row offset inside that phase
            col0 = kw // s
            # Contiguous in-VMEM gather of this tap's patch slab: (t_oh, w_out_pad, c_in)
            slab = x_ref[0, pl.ds(row0, t_oh), pl.ds(col0, w_out_pad), :]
            acc = acc + jnp.dot(slab.reshape(rows, c_in), wf_ref[tap],
                                preferred_element_type=jnp.float32)
    acc = acc + bf_ref[...]
    o_ref[...] = acc.reshape(1, t_oh, w_out_pad, cpad).astype(o_ref.dtype)


@functools.partial(
    jax.jit,
    static_argnames=("kernel_size", "padding", "stride", "stream_dtype",
                     "out_dtype", "out_layout"))
def depthwise_conv2d(x, w1, b1, w2, b2, *, kernel_size, padding, stride,
                     stream_dtype=jnp.bfloat16, out_dtype=None,
                     out_layout="NCHW"):
    """x: (N, C_in, H, W) NCHW (PyTorch convention).

    w1: (C_out, 1, K, K)      grouped-conv weight (groups = C_in)
    b1: (C_out,)
    w2: (C_out, C_out, 1, 1)  pointwise-conv weight
    b2: (C_out,)

    out_layout: "NCHW" (module semantics, default), "NHWC", or "NLC" (= (N, H*W, C),
    the layout PiT consumes; avoids the NCHW transpose round trip).
    """
    n, c_in, h, w = x.shape
    c_out = w1.shape[0]
    assert c_out % c_in == 0
    mult = c_out // c_in
    k, p, s = kernel_size, padding, stride
    h_out = (h + 2 * p - k) // s + 1
    w_out = (w + 2 * p - k) // s + 1
    assert h_out > 0 and w_out > 0
    kk = k * k
    out_dtype = x.dtype if out_dtype is None else out_dtype

    # ---- fold depthwise + 1x1 conv into per-tap fused weights ----
    # depthwise: y[o] = b1[o] + sum_tap x[o//mult, tap] * w1[o, tap]
    # pointwise: z[co] = b2[co] + sum_o w2[co, o] * y[o]
    #   => z[co] = b_fused[co] + sum_tap sum_ci patch[tap, ci] * W_fused[tap, ci, co]
    w1g = w1.reshape(c_out, kk).reshape(c_in, mult, kk)     # [ci, j, tap]
    w2f = w2.reshape(c_out, c_out)                          # [co, o]
    w2g = w2f.reshape(c_out, c_in, mult)                    # [co, ci, j]
    w_fused = jnp.einsum("cjk,ocj->kco", w1g, w2g)          # (KK, C_in, C_out)
    b_fused = w2f @ b1 + b2                                 # (C_out,)

    # ---- lane-dense output channels (multiple of 128) ----
    cpad = _round_up(c_out, 128)
    if cpad != c_out:
        w_fused = jnp.pad(w_fused, ((0, 0), (0, 0), (0, cpad - c_out)))
        b_fused = jnp.pad(b_fused, (0, cpad - c_out))
    w_fused = w_fused.astype(stream_dtype)
    b_fused = b_fused.reshape(1, cpad).astype(jnp.float32)

    # ---- output tiling: t_oh output rows per grid step, sublane-aligned width ----
    w_out_pad = _round_up(w_out, 8)
    target = max(1, 256 // w_out_pad)          # ~256 matmul rows per step
    t_oh = min(h_out, target)
    best_div = 1
    for cand in range(t_oh, 0, -1):
        if h_out % cand == 0:
            best_div = cand
            break
    if best_div * 2 >= t_oh:                   # prefer an exact divisor (no row padding)
        t_oh = best_div
    h_out_pad = _round_up(h_out, t_oh)
    n_blk = h_out_pad // t_oh

    # ---- stride-phase space-to-depth split of the padded NHWC input ----
    # Phase sizes are chosen so every in-kernel tap slice stays in bounds.
    h_ph = h_out_pad + (k - 1) // s
    w_ph = w_out_pad + (k - 1) // s
    hp2, wp2 = s * h_ph, s * w_ph
    x_nhwc = jnp.transpose(x, (0, 2, 3, 1))                       # (N, H, W, C_in)
    x_pad = jnp.pad(x_nhwc, ((0, 0),
                             (p, max(0, hp2 - h - p)),
                             (p, max(0, wp2 - w - p)),
                             (0, 0)))[:, :hp2, :wp2, :]
    x_split = x_pad.reshape(n, h_ph, s, w_ph, s, c_in)
    x_split = jnp.transpose(x_split, (0, 2, 4, 1, 3, 5))          # (N, s, s, h_ph, w_ph, C)
    x_split = x_split.reshape(n, s * s * h_ph, w_ph, c_in).astype(stream_dtype)

    # ---- VMEM budget: count both pipeline buffers of every operand ----
    bs = np.dtype(stream_dtype).itemsize
    bo = np.dtype(out_dtype).itemsize
    img_b = s * s * h_ph * w_ph * c_in * bs
    wf_b = kk * c_in * cpad * bs
    out_b = t_oh * w_out_pad * cpad * bo
    acc_b = t_oh * w_out_pad * cpad * 4
    ws = 2 * (img_b + wf_b + cpad * 4 + out_b) + acc_b
    vmem_limit = int(min(max(ws * 3 // 2 + (4 << 20), 16 << 20), 40 << 20))

    cost = pl.CostEstimate(
        flops=2 * n * n_blk * t_oh * w_out_pad * kk * c_in * cpad,
        transcendentals=0,
        bytes_accessed=(n * img_b + wf_b + cpad * 4
                        + n * h_out_pad * w_out_pad * cpad * bo),
    )

    kernel = functools.partial(_dwpw_conv_kernel, k=k, s=s, t_oh=t_oh,
                               w_out_pad=w_out_pad, c_in=c_in, h_ph=h_ph)

    out_full = pl.pallas_call(
        kernel,
        out_shape=jax.ShapeDtypeStruct((n, h_out_pad, w_out_pad, cpad), out_dtype),
        grid_spec=pltpu.PrefetchScalarGridSpec(
            num_scalar_prefetch=0,
            grid=(n, n_blk),
            in_specs=[
                # whole phase-split image of batch i; constant along the inner axis
                # -> DMA'd once per batch element
                pl.BlockSpec((1, s * s * h_ph, w_ph, c_in), lambda i, j: (i, 0, 0, 0)),
                pl.BlockSpec((kk, c_in, cpad), lambda i, j: (0, 0, 0)),   # resident weights
                pl.BlockSpec((1, cpad), lambda i, j: (0, 0)),             # resident bias
            ],
            out_specs=pl.BlockSpec((1, t_oh, w_out_pad, cpad),
                                   lambda i, j: (i, j, 0, 0)),
        ),
        compiler_params=pltpu.CompilerParams(
            dimension_semantics=("parallel", "parallel"),
            vmem_limit_bytes=vmem_limit,
        ),
        cost_estimate=cost,
    )(x_split, w_fused, b_fused)

    out = out_full[:, :h_out, :w_out, :c_out]          # no-op when nothing was padded
    if out_layout == "NHWC":
        return out
    if out_layout == "NLC":                            # (N, H*W, C) -- what PiT consumes
        return out.reshape(n, h_out * w_out, c_out)
    return jnp.transpose(out, (0, 3, 1, 2))            # default: NCHW module semantics


def _reference(x, w1, b1, w2, b2, *, padding, stride, groups):
    y = jax.lax.conv_general_dilated(
        x, w1, window_strides=(stride, stride),
        padding=((padding, padding), (padding, padding)),
        dimension_numbers=("NCHW", "OIHW", "NCHW"),
        feature_group_count=groups,
    ) + b1[None, :, None, None]
    z = jax.lax.conv_general_dilated(
        y, w2, window_strides=(1, 1), padding="VALID",
        dimension_numbers=("NCHW", "OIHW", "NCHW"),
    ) + b2[None, :, None, None]
    return z


if __name__ == "__main__":
    # Module config (as used in PiT pooling): dim_out = 2 * dim_in, k=3, s=2, p=1
    batch, dim_in, dim_out = 2, 4, 8
    kernel_size, padding, stride = 3, 1, 2
    H = W = 16

    key = jax.random.PRNGKey(0)
    kx, k1, kb1, k2, kb2 = jax.random.split(key, 5)
    x = jax.random.normal(kx, (batch, dim_in, H, W), dtype=jnp.float32)
    w1 = jax.random.normal(k1, (dim_out, 1, kernel_size, kernel_size), jnp.float32) * 0.1
    b1 = jax.random.normal(kb1, (dim_out,), jnp.float32) * 0.1
    w2 = jax.random.normal(k2, (dim_out, dim_out, 1, 1), jnp.float32) * 0.1
    b2 = jax.random.normal(kb2, (dim_out,), jnp.float32) * 0.1

    ref = _reference(x, w1, b1, w2, b2, padding=padding, stride=stride, groups=dim_in)

    # f32 streaming: strict check against the XLA conv reference (NCHW layout).
    out_f32 = depthwise_conv2d(x, w1, b1, w2, b2,
                               kernel_size=kernel_size, padding=padding, stride=stride,
                               stream_dtype=jnp.float32)
    out_f32 = jax.block_until_ready(out_f32)
    assert out_f32.shape == ref.shape, (out_f32.shape, ref.shape)
    assert jnp.allclose(out_f32, ref, atol=1e-4, rtol=1e-4), \
        float(jnp.max(jnp.abs(out_f32 - ref)))

    # Default path: bf16 streaming (f32 accumulation) -> looser tolerance.
    out_bf16 = depthwise_conv2d(x, w1, b1, w2, b2,
                                kernel_size=kernel_size, padding=padding, stride=stride)
    out_bf16 = jax.block_until_ready(out_bf16)
    assert out_bf16.shape == ref.shape
    assert jnp.allclose(out_bf16, ref, atol=3e-2, rtol=3e-2), \
        float(jnp.max(jnp.abs(out_bf16 - ref)))

    # Lane-dense "NLC" layout (what PiT consumes next) -- skips the NCHW round trip.
    out_nlc = depthwise_conv2d(x, w1, b1, w2, b2,
                               kernel_size=kernel_size, padding=padding, stride=stride,
                               out_layout="NLC")
    out_nlc = jax.block_until_ready(out_nlc)
    ref_nlc = jnp.transpose(ref, (0, 2, 3, 1)).reshape(batch, -1, dim_out)
    assert out_nlc.shape == ref_nlc.shape
    assert jnp.allclose(out_nlc, ref_nlc, atol=3e-2, rtol=3e-2), \
        float(jnp.max(jnp.abs(out_nlc - ref_nlc)))

    print("KERNEL_OK")
</pallas_src>

<mosaic_0001>
module attributes {stable_mosaic.version = 11 : i64} {
  func.func @_dwpw_conv_kernel(%arg0: i32, %arg1: i32, %arg2: memref<1x36x9x4xf32, #tpu.memory_space<vmem>>, %arg3: memref<9x4x128xf32, #tpu.memory_space<vmem>>, %arg4: memref<1x128xf32, #tpu.memory_space<vmem>>, %arg5: memref<1x8x8x128xf32, #tpu.memory_space<vmem>>) attributes {dimension_semantics = [#tpu.dimension_semantics<parallel>, #tpu.dimension_semantics<parallel>], iteration_bounds = array<i64: 2, 1>, scalar_prefetch = 0 : i64, scratch_operands = 0 : i64, tpu.core_type = #tpu.core_type<tc>, window_params = [{transform_indices = @transform_0, window_bounds = array<i64: 1, 36, 9, 4>}, {pipeline_mode = #tpu.pipeline_mode<synchronous>, transform_indices = @transform_1, window_bounds = array<i64: 9, 4, 128>}, {pipeline_mode = #tpu.pipeline_mode<synchronous>, transform_indices = @transform_2, window_bounds = array<i64: 1, 128>}, {transform_indices = @transform_3, window_bounds = array<i64: 1, 8, 8, 128>}]} {
    %c8_i32 = arith.constant 8 : i32
    %0 = arith.muli %arg1, %c8_i32 : i32
    %cst = arith.constant 0.000000e+00 : f32
    %1 = vector.broadcast %cst : f32 to vector<64x128xf32>
    %c0_i32 = arith.constant 0 : i32
    %2 = arith.addi %c0_i32, %0 : i32
    %c0 = arith.constant 0 : index
    %3 = arith.index_cast %2 : i32 to index
    %c0_0 = arith.constant 0 : index
    %c0_1 = arith.constant 0 : index
    %4 = vector.load %arg2[%c0, %3, %c0_0, %c0_1] : memref<1x36x9x4xf32, #tpu.memory_space<vmem>>, vector<1x8x8x4xf32>
    %5 = vector.shape_cast %4 : vector<1x8x8x4xf32> to vector<8x8x4xf32>
    %6 = vector.shape_cast %5 : vector<8x8x4xf32> to vector<64x4xf32>
    %c0_2 = arith.constant 0 : index
    %c0_3 = arith.constant 0 : index
    %c0_4 = arith.constant 0 : index
    %7 = vector.load %arg3[%c0_2, %c0_3, %c0_4] : memref<9x4x128xf32, #tpu.memory_space<vmem>>, vector<1x4x128xf32>
    %8 = vector.shape_cast %7 : vector<1x4x128xf32> to vector<4x128xf32>
    %cst_5 = arith.constant dense<0.000000e+00> : vector<64x128xf32>
    %9 = tpu.matmul %6, %8, %cst_5 {dimension_numbers = #tpu.dot_dimension_numbers<[1], [0], [0], [1], [0, 0, 1, 1], [], []>} : vector<64x4xf32>, vector<4x128xf32>, vector<64x128xf32> -> vector<64x128xf32>
    %10 = arith.addf %1, %9 : vector<64x128xf32>
    %c9_i32 = arith.constant 9 : i32
    %11 = arith.addi %c9_i32, %0 : i32
    %c0_6 = arith.constant 0 : index
    %12 = arith.index_cast %11 : i32 to index
    %c0_7 = arith.constant 0 : index
    %c0_8 = arith.constant 0 : index
    %13 = vector.load %arg2[%c0_6, %12, %c0_7, %c0_8] : memref<1x36x9x4xf32, #tpu.memory_space<vmem>>, vector<1x8x8x4xf32>
    %14 = vector.shape_cast %13 : vector<1x8x8x4xf32> to vector<8x8x4xf32>
    %15 = vector.shape_cast %14 : vector<8x8x4xf32> to vector<64x4xf32>
    %c1 = arith.constant 1 : index
    %c0_9 = arith.constant 0 : index
    %c0_10 = arith.constant 0 : index
    %16 = vector.load %arg3[%c1, %c0_9, %c0_10] : memref<9x4x128xf32, #tpu.memory_space<vmem>>, vector<1x4x128xf32>
    %17 = vector.shape_cast %16 : vector<1x4x128xf32> to vector<4x128xf32>
    %cst_11 = arith.constant dense<0.000000e+00> : vector<64x128xf32>
    %18 = tpu.matmul %15, %17, %cst_11 {dimension_numbers = #tpu.dot_dimension_numbers<[1], [0], [0], [1], [0, 0, 1, 1], [], []>} : vector<64x4xf32>, vector<4x128xf32>, vector<64x128xf32> -> vector<64x128xf32>
    %19 = arith.addf %10, %18 : vector<64x128xf32>
    %c0_i32_12 = arith.constant 0 : i32
    %20 = arith.addi %c0_i32_12, %0 : i32
    %c0_13 = arith.constant 0 : index
    %21 = arith.index_cast %20 : i32 to index
    %c1_14 = arith.constant 1 : index
    %c0_15 = arith.constant 0 : index
    %22 = vector.load %arg2[%c0_13, %21, %c1_14, %c0_15] : memref<1x36x9x4xf32, #tpu.memory_space<vmem>>, vector<1x8x8x4xf32>
    %23 = vector.shape_cast %22 : vector<1x8x8x4xf32> to vector<8x8x4xf32>
    %24 = vector.shape_cast %23 : vector<8x8x4xf32> to vector<64x4xf32>
    %c2 = arith.constant 2 : index
    %c0_16 = arith.constant 0 : index
    %c0_17 = arith.constant 0 : index
    %25 = vector.load %arg3[%c2, %c0_16, %c0_17] : memref<9x4x128xf32, #tpu.memory_space<vmem>>, vector<1x4x128xf32>
    %26 = vector.shape_cast %25 : vector<1x4x128xf32> to vector<4x128xf32>
    %cst_18 = arith.constant dense<0.000000e+00> : vector<64x128xf32>
    %27 = tpu.matmul %24, %26, %cst_18 {dimension_numbers = #tpu.dot_dimension_numbers<[1], [0], [0], [1], [0, 0, 1, 1], [], []>} : vector<64x4xf32>, vector<4x128xf32>, vector<64x128xf32> -> vector<64x128xf32>
    %28 = arith.addf %19, %27 : vector<64x128xf32>
    %c18_i32 = arith.constant 18 : i32
    %29 = arith.addi %c18_i32, %0 : i32
    %c0_19 = arith.constant 0 : index
    %30 = arith.index_cast %29 : i32 to index
    %c0_20 = arith.constant 0 : index
    %c0_21 = arith.constant 0 : index
    %31 = vector.load %arg2[%c0_19, %30, %c0_20, %c0_21] : memref<1x36x9x4xf32, #tpu.memory_space<vmem>>, vector<1x8x8x4xf32>
    %32 = vector.shape_cast %31 : vector<1x8x8x4xf32> to vector<8x8x4xf32>
    %33 = vector.shape_cast %32 : vector<8x8x4xf32> to vector<64x4xf32>
    %c3 = arith.constant 3 : index
    %c0_22 = arith.constant 0 : index
    %c0_23 = arith.constant 0 : index
    %34 = vector.load %arg3[%c3, %c0_22, %c0_23] : memref<9x4x128xf32, #tpu.memory_space<vmem>>, vector<1x4x128xf32>
    %35 = vector.shape_cast %34 : vector<1x4x128xf32> to vector<4x128xf32>
    %cst_24 = arith.constant dense<0.000000e+00> : vector<64x128xf32>
    %36 = tpu.matmul %33, %35, %cst_24 {dimension_numbers = #tpu.dot_dimension_numbers<[1], [0], [0], [1], [0, 0, 1, 1], [], []>} : vector<64x4xf32>, vector<4x128xf32>, vector<64x128xf32> -> vector<64x128xf32>
    %37 = arith.addf %28, %36 : vector<64x128xf32>
    %c27_i32 = arith.constant 27 : i32
    %38 = arith.addi %c27_i32, %0 : i32
    %c0_25 = arith.constant 0 : index
    %39 = arith.index_cast %38 : i32 to index
    %c0_26 = arith.constant 0 : index
    %c0_27 = arith.constant 0 : index
    %40 = vector.load %arg2[%c0_25, %39, %c0_26, %c0_27] : memref<1x36x9x4xf32, #tpu.memory_space<vmem>>, vector<1x8x8x4xf32>
    %41 = vector.shape_cast %40 : vector<1x8x8x4xf32> to vector<8x8x4xf32>
    %42 = vector.shape_cast %41 : vector<8x8x4xf32> to vector<64x4xf32>
    %c4 = arith.constant 4 : index
    %c0_28 = arith.constant 0 : index
    %c0_29 = arith.constant 0 : index
    %43 = vector.load %arg3[%c4, %c0_28, %c0_29] : memref<9x4x128xf32, #tpu.memory_space<vmem>>, vector<1x4x128xf32>
    %44 = vector.shape_cast %43 : vector<1x4x128xf32> to vector<4x128xf32>
    %cst_30 = arith.constant dense<0.000000e+00> : vector<64x128xf32>
    %45 = tpu.matmul %42, %44, %cst_30 {dimension_numbers = #tpu.dot_dimension_numbers<[1], [0], [0], [1], [0, 0, 1, 1], [], []>} : vector<64x4xf32>, vector<4x128xf32>, vector<64x128xf32> -> vector<64x128xf32>
    %46 = arith.addf %37, %45 : vector<64x128xf32>
    %c18_i32_31 = arith.constant 18 : i32
    %47 = arith.addi %c18_i32_31, %0 : i32
    %c0_32 = arith.constant 0 : index
    %48 = arith.index_cast %47 : i32 to index
    %c1_33 = arith.constant 1 : index
    %c0_34 = arith.constant 0 : index
    %49 = vector.load %arg2[%c0_32, %48, %c1_33, %c0_34] : memref<1x36x9x4xf32, #tpu.memory_space<vmem>>, vector<1x8x8x4xf32>
    %50 = vector.shape_cast %49 : vector<1x8x8x4xf32> to vector<8x8x4xf32>
    %51 = vector.shape_cast %50 : vector<8x8x4xf32> to vector<64x4xf32>
    %c5 = arith.constant 5 : index
    %c0_35 = arith.constant 0 : index
    %c0_36 = arith.constant 0 : index
    %52 = vector.load %arg3[%c5, %c0_35, %c0_36] : memref<9x4x128xf32, #tpu.memory_space<vmem>>, vector<1x4x128xf32>
    %53 = vector.shape_cast %52 : vector<1x4x128xf32> to vector<4x128xf32>
    %cst_37 = arith.constant dense<0.000000e+00> : vector<64x128xf32>
    %54 = tpu.matmul %51, %53, %cst_37 {dimension_numbers = #tpu.dot_dimension_numbers<[1], [0], [0], [1], [0, 0, 1, 1], [], []>} : vector<64x4xf32>, vector<4x128xf32>, vector<64x128xf32> -> vector<64x128xf32>
    %55 = arith.addf %46, %54 : vector<64x128xf32>
    %c1_i32 = arith.constant 1 : i32
    %56 = arith.addi %c1_i32, %0 : i32
    %c0_38 = arith.constant 0 : index
    %57 = arith.index_cast %56 : i32 to index
    %c0_39 = arith.constant 0 : index
    %c0_40 = arith.constant 0 : index
    %58 = vector.load %arg2[%c0_38, %57, %c0_39, %c0_40] : memref<1x36x9x4xf32, #tpu.memory_space<vmem>>, vector<1x8x8x4xf32>
    %59 = vector.shape_cast %58 : vector<1x8x8x4xf32> to vector<8x8x4xf32>
    %60 = vector.shape_cast %59 : vector<8x8x4xf32> to vector<64x4xf32>
    %c6 = arith.constant 6 : index
    %c0_41 = arith.constant 0 : index
    %c0_42 = arith.constant 0 : index
    %61 = vector.load %arg3[%c6, %c0_41, %c0_42] : memref<9x4x128xf32, #tpu.memory_space<vmem>>, vector<1x4x128xf32>
    %62 = vector.shape_cast %61 : vector<1x4x128xf32> to vector<4x128xf32>
    %cst_43 = arith.constant dense<0.000000e+00> : vector<64x128xf32>
    %63 = tpu.matmul %60, %62, %cst_43 {dimension_numbers = #tpu.dot_dimension_numbers<[1], [0], [0], [1], [0, 0, 1, 1], [], []>} : vector<64x4xf32>, vector<4x128xf32>, vector<64x128xf32> -> vector<64x128xf32>
    %64 = arith.addf %55, %63 : vector<64x128xf32>
    %c10_i32 = arith.constant 10 : i32
    %65 = arith.addi %c10_i32, %0 : i32
    %c0_44 = arith.constant 0 : index
    %66 = arith.index_cast %65 : i32 to index
    %c0_45 = arith.constant 0 : index
    %c0_46 = arith.constant 0 : index
    %67 = vector.load %arg2[%c0_44, %66, %c0_45, %c0_46] : memref<1x36x9x4xf32, #tpu.memory_space<vmem>>, vector<1x8x8x4xf32>
    %68 = vector.shape_cast %67 : vector<1x8x8x4xf32> to vector<8x8x4xf32>
    %69 = vector.shape_cast %68 : vector<8x8x4xf32> to vector<64x4xf32>
    %c7 = arith.constant 7 : index
    %c0_47 = arith.constant 0 : index
    %c0_48 = arith.constant 0 : index
    %70 = vector.load %arg3[%c7, %c0_47, %c0_48] : memref<9x4x128xf32, #tpu.memory_space<vmem>>, vector<1x4x128xf32>
    %71 = vector.shape_cast %70 : vector<1x4x128xf32> to vector<4x128xf32>
    %cst_49 = arith.constant dense<0.000000e+00> : vector<64x128xf32>
    %72 = tpu.matmul %69, %71, %cst_49 {dimension_numbers = #tpu.dot_dimension_numbers<[1], [0], [0], [1], [0, 0, 1, 1], [], []>} : vector<64x4xf32>, vector<4x128xf32>, vector<64x128xf32> -> vector<64x128xf32>
    %73 = arith.addf %64, %72 : vector<64x128xf32>
    %c1_i32_50 = arith.constant 1 : i32
    %74 = arith.addi %c1_i32_50, %0 : i32
    %c0_51 = arith.constant 0 : index
    %75 = arith.index_cast %74 : i32 to index
    %c1_52 = arith.constant 1 : index
    %c0_53 = arith.constant 0 : index
    %76 = vector.load %arg2[%c0_51, %75, %c1_52, %c0_53] : memref<1x36x9x4xf32, #tpu.memory_space<vmem>>, vector<1x8x8x4xf32>
    %77 = vector.shape_cast %76 : vector<1x8x8x4xf32> to vector<8x8x4xf32>
    %78 = vector.shape_cast %77 : vector<8x8x4xf32> to vector<64x4xf32>
    %c8 = arith.constant 8 : index
    %c0_54 = arith.constant 0 : index
    %c0_55 = arith.constant 0 : index
    %79 = vector.load %arg3[%c8, %c0_54, %c0_55] : memref<9x4x128xf32, #tpu.memory_space<vmem>>, vector<1x4x128xf32>
    %80 = vector.shape_cast %79 : vector<1x4x128xf32> to vector<4x128xf32>
    %cst_56 = arith.constant dense<0.000000e+00> : vector<64x128xf32>
    %81 = tpu.matmul %78, %80, %cst_56 {dimension_numbers = #tpu.dot_dimension_numbers<[1], [0], [0], [1], [0, 0, 1, 1], [], []>} : vector<64x4xf32>, vector<4x128xf32>, vector<64x128xf32> -> vector<64x128xf32>
    %82 = arith.addf %73, %81 : vector<64x128xf32>
    %c0_57 = arith.constant 0 : index
    %c0_58 = arith.constant 0 : index
    %83 = vector.load %arg4[%c0_57, %c0_58] : memref<1x128xf32, #tpu.memory_space<vmem>>, vector<1x128xf32>
    %84 = vector.broadcast %83 : vector<1x128xf32> to vector<64x128xf32>
    %85 = arith.addf %82, %84 : vector<64x128xf32>
    %86 = vector.shape_cast %85 : vector<64x128xf32> to vector<1x8x8x128xf32>
    %c0_59 = arith.constant 0 : index
    %c0_60 = arith.constant 0 : index
    %c0_61 = arith.constant 0 : index
    %c0_62 = arith.constant 0 : index
    %87 = vector.load %arg5[%c0_59, %c0_60, %c0_61, %c0_62] : memref<1x8x8x128xf32, #tpu.memory_space<vmem>>, vector<1x8x8x128xf32>
    tpu.vector_store %arg5[%c0_59, %c0_60, %c0_61, %c0_62], %86 {strides = array<i32>} : memref<1x8x8x128xf32, #tpu.memory_space<vmem>>, vector<1x8x8x128xf32>,
    return
  }
  func.func @transform_0(%arg0: i32, %arg1: i32) -> (i32, i32, i32, i32) {
    %c0_i32 = arith.constant 0 : i32
    %c0_i32_0 = arith.constant 0 : i32
    %c0_i32_1 = arith.constant 0 : i32
    %c0_i32_2 = arith.constant 0 : i32
    return %arg0, %c0_i32, %c0_i32_0, %c0_i32_1 : i32, i32, i32, i32
  }
  func.func @transform_1(%arg0: i32, %arg1: i32) -> (i32, i32, i32) {
    %c0_i32 = arith.constant 0 : i32
    %c0_i32_0 = arith.constant 0 : i32
    %c0_i32_1 = arith.constant 0 : i32
    %c0_i32_2 = arith.constant 0 : i32
    return %c0_i32, %c0_i32_0, %c0_i32_1 : i32, i32, i32
  }
  func.func @transform_2(%arg0: i32, %arg1: i32) -> (i32, i32) {
    %c0_i32 = arith.constant 0 : i32
    %c0_i32_0 = arith.constant 0 : i32
    %c0_i32_1 = arith.constant 0 : i32
    return %c0_i32, %c0_i32_0 : i32, i32
  }
  func.func @transform_3(%arg0: i32, %arg1: i32) -> (i32, i32, i32, i32) {
    %c0_i32 = arith.constant 0 : i32
    %c0_i32_0 = arith.constant 0 : i32
    %c0_i32_1 = arith.constant 0 : i32
    return %arg0, %arg1, %c0_i32, %c0_i32_0 : i32, i32, i32, i32
  }
}

</mosaic_0001>

<llo_original>
// kernel: depthwise_conv2d.1
$region0: #{depthwise_conv2d.1}
  #allocation0 [shape = 'u32[]', space=smem, size = 0x4, offset = 0x4, fixed_abs, tag = 'smem constant byte address 0x4 - core index']
  #allocation1 [shape = 'u32[72,128]{1,0:T(1,128)}', space=vmem, size = 0x9000, scoped, tag = 'internal scratch']
  %s0 = inlined_call_operand.vmem [shape: f32[2,36,9,4], index: 0, kind: input, shape index: {}]
  %s1 = inlined_call_operand.vmem [shape: f32[9,4,128], index: 1, kind: input, shape index: {}]
  %s2 = inlined_call_operand.vmem [shape: f32[1,128], index: 2, kind: input, shape index: {}]
  %s3 = inlined_call_operand.vmem [shape: f32[2,8,8,128], index: 3, kind: output, shape index: {}]
  %s4 = sld [smem:[#allocation0]]
  $region45: #{depthwise_conv2d.1} parent=0
    _
  %s6 = ssub.s32 1, %s4
  %s7 = scalar_select 0, %s6, %s4
  loop: start=0, step=1, limit=4
  $region2: #{depthwise_conv2d.1} parent=0 // loop_pre_header
    _
  $region3: #{depthwise_conv2d.1} parent=0 // loop_header
    %s9 = sphi 0, %s13
    %p10 = scmp.ge.s32.totalorder %s9, 4
    %s16 = sphi 0, %s28
    %s17 = sphi 0, %s24
    %s18 = sphi 0, %s16
    %s19 = sphi 0, %s17
    %s20 = sphi 0, %s18
    %s21 = sphi 0, %s19
    %s31 = sphi 0, %s33
    %s34 = sphi 0, %s31
    %s35 = sphi 0, %s34
    %s51 = sphi 0, %s35
    %s55 = sphi 0, %s55
    %s57 = sphi 0, %s55
    %s58 = sphi 0, %s57
    %s72 = sphi 0, %s58
    %s76 = sphi 0, %s76
    %s78 = sphi 0, %s76
    %s79 = sphi 0, %s78
    %s93 = sphi 0, %s79
    %s101 = sphi 0, %s103
    %s104 = sphi 0, %s101
    %s105 = sphi 0, %s104
    %s121 = sphi 0, %s105
  $region4: #{depthwise_conv2d.1} parent=0 // loop_header_branch
    %12 = sbr.rel (%p10) target = $region8
  $region5: #{depthwise_conv2d.1} parent=0 // loop_body
    %s14 = ssub.s32 %s9, 1
    %s15 = ssub.s32 %s9, 2
    %s22 = sadd.s32 1, %s17
    %p23 = scmp.ge.s32.totalorder %s22, 1
    %s24 = scalar_select %p23, 0, %s22
    %s25 = sadd.s32 1, %s16
    %s26 = scalar_select %p23, %s25, %s16
    %p27 = scmp.ge.s32.totalorder %s26, 2
    %s28 = scalar_select %p27, 0, %s26
    %s29 = ssub.s32 %s16, %s28
    %p30 = scmp.eq.s32.totalorder %s29, 0
    %s32 = sadd.s32 %s31, 1
    %s33 = scalar_select %p30, %s31, %s32
    %p36 = pneg %p30
    %p37 = scmp.eq.s32.totalorder %s9, 1
    %p38 = por %p36, %p37
    %p39 = scmp.ne.s32.totalorder %s31, %s34
    %p40 = scmp.eq.s32.totalorder %s9, 0
    %p41 = por %p39, %p40
    %p42 = scmp.ne.s32.totalorder %s31, %s34
    %p43 = scmp.eq.s32.totalorder %s14, 1
    %p44 = por %p42, %p43
    %p45 = scmp.ne.s32.totalorder %s34, %s35
    %p46 = scmp.eq.s32.totalorder %s14, 0
    %p47 = por %p45, %p46
    %p48 = scmp.ne.s32.totalorder %s34, %s35
    %p49 = scmp.eq.s32.totalorder %s15, 1
    %p50 = por %p48, %p49
    %p52 = scmp.ne.s32.totalorder %s35, %s51
    %p53 = scmp.eq.s32.totalorder %s15, 0
    %p54 = por %p52, %p53
    %s56 = sadd.s32 %s55, 1
    %p59 = scmp.eq.s32.totalorder %s9, 1
    %p60 = scmp.ne.s32.totalorder %s55, %s57
    %p61 = scmp.eq.s32.totalorder %s9, 0
    %p62 = por %p60, %p61
    %p63 = scmp.ne.s32.totalorder %s55, %s57
    %p64 = scmp.eq.s32.totalorder %s14, 1
    %p65 = por %p63, %p64
    %p66 = scmp.ne.s32.totalorder %s57, %s58
    %p67 = scmp.eq.s32.totalorder %s14, 0
    %p68 = por %p66, %p67
    %p69 = scmp.ne.s32.totalorder %s57, %s58
    %p70 = scmp.eq.s32.totalorder %s15, 1
    %p71 = por %p69, %p70
    %p73 = scmp.ne.s32.totalorder %s58, %s72
    %p74 = scmp.eq.s32.totalorder %s15, 0
    %p75 = por %p73, %p74
    %s77 = sadd.s32 %s76, 1
    %p80 = scmp.eq.s32.totalorder %s9, 1
    %p81 = scmp.ne.s32.totalorder %s76, %s78
    %p82 = scmp.eq.s32.totalorder %s9, 0
    %p83 = por %p81, %p82
    %p84 = scmp.ne.s32.totalorder %s76, %s78
    %p85 = scmp.eq.s32.totalorder %s14, 1
    %p86 = por %p84, %p85
    %p87 = scmp.ne.s32.totalorder %s78, %s79
    %p88 = scmp.eq.s32.totalorder %s14, 0
    %p89 = por %p87, %p88
    %p90 = scmp.ne.s32.totalorder %s78, %s79
    %p91 = scmp.eq.s32.totalorder %s15, 1
    %p92 = por %p90, %p91
    %p94 = scmp.ne.s32.totalorder %s79, %s93
    %p95 = scmp.eq.s32.totalorder %s15, 0
    %p96 = por %p94, %p95
    %s97 = ssub.s32 %s16, %s28
    %s98 = ssub.s32 %s17, %s24
    %s99 = sor.u32 %s97, %s98
    %p100 = scmp.eq.s32.totalorder %s99, 0
    %s102 = sadd.s32 %s101, 1
    %s103 = scalar_select %p100, %s101, %s102
    %p106 = pneg %p100
    %p107 = scmp.eq.s32.totalorder %s9, 1
    %p108 = por %p106, %p107
    %p109 = scmp.ne.s32.totalorder %s101, %s104
    %p110 = scmp.eq.s32.totalorder %s9, 0
    %p111 = por %p109, %p110
    %p112 = scmp.ne.s32.totalorder %s101, %s104
    %p113 = scmp.eq.s32.totalorder %s14, 1
    %p114 = por %p112, %p113
    %p115 = scmp.ne.s32.totalorder %s104, %s105
    %p116 = scmp.eq.s32.totalorder %s14, 0
    %p117 = por %p115, %p116
    %p118 = scmp.ne.s32.totalorder %s104, %s105
    %p119 = scmp.eq.s32.totalorder %s15, 1
    %p120 = por %p118, %p119
    %p122 = scmp.ne.s32.totalorder %s105, %s121
    %p123 = scmp.eq.s32.totalorder %s15, 0
    %p124 = por %p122, %p123
    %p125 = scmp.le.s32.totalorder 1, %s9
    %p126 = scmp.lt.s32.totalorder %s9, 3
    %p127 = pnand %p125, %p126
    %p128 = pneg %p127
    // Predicated region
    $region9: #{depthwise_conv2d.1} parent=5 // pred_check
      _
    $region10: #{depthwise_conv2d.1} parent=5 // pred_check_branch
      %130 = sbr.rel (%p127) target = $region12
    $region11: #{depthwise_conv2d.1} parent=5 // pred_region
      %s131 = ssub.s32 %s9, 1
      // Predicated region
      $region13: #{depthwise_conv2d.1} parent=11 // pred_check
        %p132 = pneg %p68
      $region14: #{depthwise_conv2d.1} parent=11 // pred_check_branch
        %134 = sbr.rel (%p132) target = $region16
      $region15: #{depthwise_conv2d.1} parent=11 // pred_region
        _
      $region16: #{depthwise_conv2d.1} parent=11 // pred_fallthru
        _
      // Predicated region
      $region17: #{depthwise_conv2d.1} parent=11 // pred_check
        %p135 = pneg %p89
      $region18: #{depthwise_conv2d.1} parent=11 // pred_check_branch
        %137 = sbr.rel (%p135) target = $region20
      $region19: #{depthwise_conv2d.1} parent=11 // pred_region
        _
      $region20: #{depthwise_conv2d.1} parent=11 // pred_fallthru
        _
    $region12: #{depthwise_conv2d.1} parent=5 // pred_fallthru
      _
    %p138 = scmp.lt.s32.totalorder %s9, 2
    // Predicated region
    $region21: #{depthwise_conv2d.1} parent=5 // pred_check
      %p139 = pneg %p138
    $region22: #{depthwise_conv2d.1} parent=5 // pred_check_branch
      %141 = sbr.rel (%p139) target = $region24
    $region23: #{depthwise_conv2d.1} parent=5 // pred_region
      // Predicated region
      $region25: #{depthwise_conv2d.1} parent=23 // pred_check
        %p142 = pneg %p41
      $region26: #{depthwise_conv2d.1} parent=23 // pred_check_branch
        %144 = sbr.rel (%p142) target = $region28
      $region27: #{depthwise_conv2d.1} parent=23 // pred_region
        %p145 = scmp.lt.s32.totalorder %s16, 1
        %s146 = scalar_select %p145, %s16, 1
        %s147 = smul.addr %s146, 72
        %s148 = smul.addr %s147, 8
        %s149 = scalar_lea.vmem %s0, %s148
      $region28: #{depthwise_conv2d.1} parent=23 // pred_fallthru
        _
    $region24: #{depthwise_conv2d.1} parent=5 // pred_fallthru
      _
    %p150 = scmp.le.s32.totalorder 1, %s9
    %p151 = scmp.lt.s32.totalorder %s9, 3
    %p152 = pnand %p150, %p151
    %p153 = pneg %p152
    // Predicated region
    $region29: #{depthwise_conv2d.1} parent=5 // pred_check
      _
    $region30: #{depthwise_conv2d.1} parent=5 // pred_check_branch
      %155 = sbr.rel (%p152) target = $region32
    $region31: #{depthwise_conv2d.1} parent=5 // pred_region
      %s156 = ssub.s32 %s9, 1
      %p157 = scmp.lt.s32.totalorder %s18, 1
      %s158 = scalar_select %p157, %s18, 1
      %s159 = smul.addr %s158, 72
      %s160 = smul.addr %s159, 8
      %s161 = scalar_lea.vmem %s0, %s160
      %p162 = pneg %p47
      %p163 = pneg %p44
      %p164 = pneg %p68
      %p165 = pneg %p65
      %p166 = pneg %p89
      %p167 = pneg %p86
      %p168 = pneg %p117
      %p169 = pneg %p114
      %s170 = smul.u32 8, %s19
      %p171 = scmp.lt.s32.totalorder %s18, 1
      %s172 = scalar_select %p171, %s18, 1
      %p173 = scmp.lt.s32.totalorder %s170, 7
      %s174 = scalar_select %p173, %s170, 7
      %s175 = smul.addr %s172, 8
      %s176 = sadd.s32 %s174, %s175
      %s177 = smul.addr %s176, 8
      %s178 = scalar_lea.vmem %s3, %s177
      %p179 = scmp.lt.s32.totalorder %s18, 1
      %s180 = scalar_select %p179, %s18, 1
      %s181 = smul.addr %s180, 72
      %s182 = smul.addr %s181, 8
      %s183 = scalar_lea.vmem %s0, %s182
      %s184 = smul.u32 8, %s19
      %p185 = scmp.lt.s32.totalorder %s18, 1
      %s186 = scalar_select %p185, %s18, 1
      %p187 = scmp.lt.s32.totalorder %s184, 7
      %s188 = scalar_select %p187, %s184, 7
      %s189 = smul.addr %s186, 8
      %s190 = sadd.s32 %s188, %s189
      %s191 = smul.addr %s190, 8
      %s192 = scalar_lea.vmem %s3, %s191
      %s193 = smul.u32 8, %s19
      %s194 = smul.u32 %s19, 8
      %s195 = smul.u32 %s194, 16
      %s196 = scalar_lea.vmem %s183, %s195
      %v197 = vld [vmem:[%s196] sm:$0xff]
      %v198 = vld [vmem:[%s196 + $0x10] sm:$0xff]
      %v199 = vld [vmem:[%s196 + $0x20] sm:$0xff]
      %v200 = vld [vmem:[%s196 + $0x30] sm:$0xff]
      %v201 = vld [vmem:[%s196 + $0x40] sm:$0xff]
      %v202 = vld [vmem:[%s196 + $0x50] sm:$0xff]
      %v203 = vld [vmem:[%s196 + $0x60] sm:$0xff]
      %v204 = vld [vmem:[%s196 + $0x70] sm:$0xff]
      %v205 = vld [vmem:[%s1] sm:$0xf]
      %s206 = sadd.s32 %s194, 9
      %s207 = smul.u32 %s206, 16
      %s208 = scalar_lea.vmem %s183, %s207
      %v209 = vld [vmem:[%s208] sm:$0xff]
      %v210 = vld [vmem:[%s208 + $0x10] sm:$0xff]
      %v211 = vld [vmem:[%s208 + $0x20] sm:$0xff]
      %v212 = vld [vmem:[%s208 + $0x30] sm:$0xff]
      %v213 = vld [vmem:[%s208 + $0x40] sm:$0xff]
      %v214 = vld [vmem:[%s208 + $0x50] sm:$0xff]
      %v215 = vld [vmem:[%s208 + $0x60] sm:$0xff]
      %v216 = vld [vmem:[%s208 + $0x70] sm:$0xff]
      %s217 = scalar_lea.vmem %s1, 4
      %v218 = vld [vmem:[%s217] sm:$0xf]
      %vm219 = vcmask 31744
      %v221 = vsel %vm219, %v209, 0
      %v224 = vsel %vm219, %v210, 0
      %v227 = vsel %vm219, %v211, 0
      %v230 = vsel %vm219, %v212, 0
      %v233 = vsel %vm219, %v213, 0
      %v236 = vsel %vm219, %v214, 0
      %v239 = vsel %vm219, %v215, 0
      %v242 = vsel %vm219, %v216, 0
      %vm244 = vcmask 1043456
      %v246 = vsel %vm244, %v218, 0
      %248 = vmatpush.msra.mxu0 0.0
      %249 = vmatpush.msra.mxu0 0.0
      %250 = vmatpush.msra.mxu0 0.0
      %251 = vmatpush.msra.mxu0 0.0
      %252 = vmatpush.msra.mxu0 0.0
      %253 = vmatpush.msra.mxu0 0.0
      %254 = vmatpush.msra.mxu0 0.0
      %255 = vmatpush.msra.mxu0 0.0
      %256 = vmatpush.msra.mxu0 0.0
      %257 = vmatpush.msra.mxu0 0.0
      %258 = vmatpush.msra.mxu0 0.0
      %259 = vmatpush.msra.mxu0 0.0
      %260 = vmatpush.msra.mxu0 0.0
      %261 = vmatpush.msra.mxu0 0.0
      %262 = vmatpush.msra.mxu0 0.0
      %263 = vmatpush.msra.mxu0 %v246
      %264 = vmatmul.f32.gmra.mxu0 %v221
      %v265 = vpop.f32.mrf.mxu0
      %v266 = vadd.f32 0.0, %v265
      %267 = vmatmul.f32.gmra.mxu0 %v224
      %v268 = vpop.f32.mrf.mxu0
      %v269 = vadd.f32 0.0, %v268
      %270 = vmatmul.f32.gmra.mxu0 %v227
      %v271 = vpop.f32.mrf.mxu0
      %v272 = vadd.f32 0.0, %v271
      %273 = vmatmul.f32.gmra.mxu0 %v230
      %v274 = vpop.f32.mrf.mxu0
      %v275 = vadd.f32 0.0, %v274
      %276 = vmatmul.f32.gmra.mxu0 %v233
      %v277 = vpop.f32.mrf.mxu0
      %v278 = vadd.f32 0.0, %v277
      %279 = vmatmul.f32.gmra.mxu0 %v236
      %v280 = vpop.f32.mrf.mxu0
      %v281 = vadd.f32 0.0, %v280
      %282 = vmatmul.f32.gmra.mxu0 %v239
      %v283 = vpop.f32.mrf.mxu0
      %v284 = vadd.f32 0.0, %v283
      %285 = vmatmul.f32.gmra.mxu0 %v242
      %v286 = vpop.f32.mrf.mxu0
      %v287 = vadd.f32 0.0, %v286
      %288 = vdwg.mxu0
      %v290 = vsel %vm219, %v197, 0
      %v293 = vsel %vm219, %v198, 0
      %v296 = vsel %vm219, %v199, 0
      %v299 = vsel %vm219, %v200, 0
      %v302 = vsel %vm219, %v201, 0
      %v305 = vsel %vm219, %v202, 0
      %v308 = vsel %vm219, %v203, 0
      %v311 = vsel %vm219, %v204, 0
      %v314 = vsel %vm244, %v205, 0
      %316 = vmatpush.msra.mxu0 0.0
      %317 = vmatpush.msra.mxu0 0.0
      %318 = vmatpush.msra.mxu0 0.0
      %319 = vmatpush.msra.mxu0 0.0
      %320 = vmatpush.msra.mxu0 0.0
      %321 = vmatpush.msra.mxu0 0.0
      %322 = vmatpush.msra.mxu0 0.0
      %323 = vmatpush.msra.mxu0 0.0
      %324 = vmatpush.msra.mxu0 0.0
      %325 = vmatpush.msra.mxu0 0.0
      %326 = vmatpush.msra.mxu0 0.0
      %327 = vmatpush.msra.mxu0 0.0
      %328 = vmatpush.msra.mxu0 0.0
      %329 = vmatpush.msra.mxu0 0.0
      %330 = vmatpush.msra.mxu0 0.0
      %331 = vmatpush.msra.mxu0 %v314
      %332 = vmatmul.f32.gmra.mxu0 %v290
      %v333 = vpop.f32.mrf.mxu0
      %v334 = vadd.f32 %v266, %v333
      %335 = vmatmul.f32.gmra.mxu0 %v293
      %v336 = vpop.f32.mrf.mxu0
      %v337 = vadd.f32 %v269, %v336
      %338 = vmatmul.f32.gmra.mxu0 %v296
      %v339 = vpop.f32.mrf.mxu0
      %v340 = vadd.f32 %v272, %v339
      %341 = vmatmul.f32.gmra.mxu0 %v299
      %v342 = vpop.f32.mrf.mxu0
      %v343 = vadd.f32 %v275, %v342
      %344 = vmatmul.f32.gmra.mxu0 %v302
      %v345 = vpop.f32.mrf.mxu0
      %v346 = vadd.f32 %v278, %v345
      %347 = vmatmul.f32.gmra.mxu0 %v305
      %v348 = vpop.f32.mrf.mxu0
      %v349 = vadd.f32 %v281, %v348
      %350 = vmatmul.f32.gmra.mxu0 %v308
      %v351 = vpop.f32.mrf.mxu0
      %v352 = vadd.f32 %v284, %v351
      %353 = vmatmul.f32.gmra.mxu0 %v311
      %v354 = vpop.f32.mrf.mxu0
      %v355 = vadd.f32 %v287, %v354
      %356 = vdwg.mxu0
      %v357 = vld [vmem:[%s196 + $0x1] sm:$0xff]
      %v358 = vld [vmem:[%s196 + $0x11] sm:$0xff]
      %v359 = vld [vmem:[%s196 + $0x21] sm:$0xff]
      %v360 = vld [vmem:[%s196 + $0x31] sm:$0xff]
      %v361 = vld [vmem:[%s196 + $0x41] sm:$0xff]
      %v362 = vld [vmem:[%s196 + $0x51] sm:$0xff]
      %v363 = vld [vmem:[%s196 + $0x61] sm:$0xff]
      %v364 = vld [vmem:[%s196 + $0x71] sm:$0xff]
      %s365 = scalar_lea.vmem %s1, 8
      %v366 = vld [vmem:[%s365] sm:$0xf]
      %v368 = vsel %vm219, %v357, 0
      %v371 = vsel %vm219, %v358, 0
      %v374 = vsel %vm219, %v359, 0
      %v377 = vsel %vm219, %v360, 0
      %v380 = vsel %vm219, %v361, 0
      %v383 = vsel %vm219, %v362, 0
      %v386 = vsel %vm219, %v363, 0
      %v389 = vsel %vm219, %v364, 0
      %v392 = vsel %vm244, %v366, 0
      %394 = vmatpush.msra.mxu0 0.0
      %395 = vmatpush.msra.mxu0 0.0
      %396 = vmatpush.msra.mxu0 0.0
      %397 = vmatpush.msra.mxu0 0.0
      %398 = vmatpush.msra.mxu0 0.0
      %399 = vmatpush.msra.mxu0 0.0
      %400 = vmatpush.msra.mxu0 0.0
      %401 = vmatpush.msra.mxu0 0.0
      %402 = vmatpush.msra.mxu0 0.0
      %403 = vmatpush.msra.mxu0 0.0
      %404 = vmatpush.msra.mxu0 0.0
      %405 = vmatpush.msra.mxu0 0.0
      %406 = vmatpush.msra.mxu0 0.0
      %407 = vmatpush.msra.mxu0 0.0
      %408 = vmatpush.msra.mxu0 0.0
      %409 = vmatpush.msra.mxu0 %v392
      %410 = vmatmul.f32.gmra.mxu0 %v368
      %v411 = vpop.f32.mrf.mxu0
      %v412 = vadd.f32 0.0, %v411
      %413 = vmatmul.f32.gmra.mxu0 %v371
      %v414 = vpop.f32.mrf.mxu0
      %v415 = vadd.f32 0.0, %v414
      %416 = vmatmul.f32.gmra.mxu0 %v374
      %v417 = vpop.f32.mrf.mxu0
      %v418 = vadd.f32 0.0, %v417
      %419 = vmatmul.f32.gmra.mxu0 %v377
      %v420 = vpop.f32.mrf.mxu0
      %v421 = vadd.f32 0.0, %v420
      %422 = vmatmul.f32.gmra.mxu0 %v380
      %v423 = vpop.f32.mrf.mxu0
      %v424 = vadd.f32 0.0, %v423
      %425 = vmatmul.f32.gmra.mxu0 %v383
      %v426 = vpop.f32.mrf.mxu0
      %v427 = vadd.f32 0.0, %v426
      %428 = vmatmul.f32.gmra.mxu0 %v386
      %v429 = vpop.f32.mrf.mxu0
      %v430 = vadd.f32 0.0, %v429
      %431 = vmatmul.f32.gmra.mxu0 %v389
      %v432 = vpop.f32.mrf.mxu0
      %v433 = vadd.f32 0.0, %v432
      %434 = vdwg.mxu0
      %v435 = vadd.f32 %v334, %v412
      %v436 = vadd.f32 %v337, %v415
      %v437 = vadd.f32 %v340, %v418
      %v438 = vadd.f32 %v343, %v421
      %v439 = vadd.f32 %v346, %v424
      %v440 = vadd.f32 %v349, %v427
      %v441 = vadd.f32 %v352, %v430
      %v442 = vadd.f32 %v355, %v433
      %s443 = sadd.s32 %s194, 18
      %s444 = smul.u32 %s443, 16
      %s445 = scalar_lea.vmem %s183, %s444
      %v446 = vld [vmem:[%s445] sm:$0xff]
      %v447 = vld [vmem:[%s445 + $0x10] sm:$0xff]
      %v448 = vld [vmem:[%s445 + $0x20] sm:$0xff]
      %v449 = vld [vmem:[%s445 + $0x30] sm:$0xff]
      %v450 = vld [vmem:[%s445 + $0x40] sm:$0xff]
      %v451 = vld [vmem:[%s445 + $0x50] sm:$0xff]
      %v452 = vld [vmem:[%s445 + $0x60] sm:$0xff]
      %v453 = vld [vmem:[%s445 + $0x70] sm:$0xff]
      %s454 = scalar_lea.vmem %s1, 12
      %v455 = vld [vmem:[%s454] sm:$0xf]
      %v457 = vsel %vm219, %v446, 0
      %v460 = vsel %vm219, %v447, 0
      %v463 = vsel %vm219, %v448, 0
      %v466 = vsel %vm219, %v449, 0
      %v469 = vsel %vm219, %v450, 0
      %v472 = vsel %vm219, %v451, 0
      %v475 = vsel %vm219, %v452, 0
      %v478 = vsel %vm219, %v453, 0
      %v481 = vsel %vm244, %v455, 0
      %483 = vmatpush.msra.mxu0 0.0
      %484 = vmatpush.msra.mxu0 0.0
      %485 = vmatpush.msra.mxu0 0.0
      %486 = vmatpush.msra.mxu0 0.0
      %487 = vmatpush.msra.mxu0 0.0
      %488 = vmatpush.msra.mxu0 0.0
      %489 = vmatpush.msra.mxu0 0.0
      %490 = vmatpush.msra.mxu0 0.0
      %491 = vmatpush.msra.mxu0 0.0
      %492 = vmatpush.msra.mxu0 0.0
      %493 = vmatpush.msra.mxu0 0.0
      %494 = vmatpush.msra.mxu0 0.0
      %495 = vmatpush.msra.mxu0 0.0
      %496 = vmatpush.msra.mxu0 0.0
      %497 = vmatpush.msra.mxu0 0.0
      %498 = vmatpush.msra.mxu0 %v481
      %499 = vmatmul.f32.gmra.mxu0 %v457
      %v500 = vpop.f32.mrf.mxu0
      %v501 = vadd.f32 0.0, %v500
      %502 = vmatmul.f32.gmra.mxu0 %v460
      %v503 = vpop.f32.mrf.mxu0
      %v504 = vadd.f32 0.0, %v503
      %505 = vmatmul.f32.gmra.mxu0 %v463
      %v506 = vpop.f32.mrf.mxu0
      %v507 = vadd.f32 0.0, %v506
      %508 = vmatmul.f32.gmra.mxu0 %v466
      %v509 = vpop.f32.mrf.mxu0
      %v510 = vadd.f32 0.0, %v509
      %511 = vmatmul.f32.gmra.mxu0 %v469
      %v512 = vpop.f32.mrf.mxu0
      %v513 = vadd.f32 0.0, %v512
      %514 = vmatmul.f32.gmra.mxu0 %v472
      %v515 = vpop.f32.mrf.mxu0
      %v516 = vadd.f32 0.0, %v515
      %517 = vmatmul.f32.gmra.mxu0 %v475
      %v518 = vpop.f32.mrf.mxu0
      %v519 = vadd.f32 0.0, %v518
      %520 = vmatmul.f32.gmra.mxu0 %v478
      %v521 = vpop.f32.mrf.mxu0
      %v522 = vadd.f32 0.0, %v521
      %523 = vdwg.mxu0
      %v524 = vadd.f32 %v435, %v501
      %v525 = vadd.f32 %v436, %v504
      %v526 = vadd.f32 %v437, %v507
      %v527 = vadd.f32 %v438, %v510
      %v528 = vadd.f32 %v439, %v513
      %v529 = vadd.f32 %v440, %v516
      %v530 = vadd.f32 %v441, %v519
      %v531 = vadd.f32 %v442, %v522
      %s532 = sadd.s32 %s194, 27
      %s533 = smul.u32 %s532, 16
      %s534 = scalar_lea.vmem %s183, %s533
      %v535 = vld [vmem:[%s534] sm:$0xff]
      %v536 = vld [vmem:[%s534 + $0x10] sm:$0xff]
      %v537 = vld [vmem:[%s534 + $0x20] sm:$0xff]
      %v538 = vld [vmem:[%s534 + $0x30] sm:$0xff]
      %v539 = vld [vmem:[%s534 + $0x40] sm:$0xff]
      %v540 = vld [vmem:[%s534 + $0x50] sm:$0xff]
      %v541 = vld [vmem:[%s534 + $0x60] sm:$0xff]
      %v542 = vld [vmem:[%s534 + $0x70] sm:$0xff]
      %s543 = scalar_lea.vmem %s1, 16
      %v544 = vld [vmem:[%s543] sm:$0xf]
      %v546 = vsel %vm219, %v535, 0
      %v549 = vsel %vm219, %v536, 0
      %v552 = vsel %vm219, %v537, 0
      %v555 = vsel %vm219, %v538, 0
      %v558 = vsel %vm219, %v539, 0
      %v561 = vsel %vm219, %v540, 0
      %v564 = vsel %vm219, %v541, 0
      %v567 = vsel %vm219, %v542, 0
      %v570 = vsel %vm244, %v544, 0
      %572 = vmatpush.msra.mxu0 0.0
      %573 = vmatpush.msra.mxu0 0.0
      %574 = vmatpush.msra.mxu0 0.0
      %575 = vmatpush.msra.mxu0 0.0
      %576 = vmatpush.msra.mxu0 0.0
      %577 = vmatpush.msra.mxu0 0.0
      %578 = vmatpush.msra.mxu0 0.0
      %579 = vmatpush.msra.mxu0 0.0
      %580 = vmatpush.msra.mxu0 0.0
      %581 = vmatpush.msra.mxu0 0.0
      %582 = vmatpush.msra.mxu0 0.0
      %583 = vmatpush.msra.mxu0 0.0
      %584 = vmatpush.msra.mxu0 0.0
      %585 = vmatpush.msra.mxu0 0.0
      %586 = vmatpush.msra.mxu0 0.0
      %587 = vmatpush.msra.mxu0 %v570
      %588 = vmatmul.f32.gmra.mxu0 %v546
      %v589 = vpop.f32.mrf.mxu0
      %v590 = vadd.f32 0.0, %v589
      %591 = vmatmul.f32.gmra.mxu0 %v549
      %v592 = vpop.f32.mrf.mxu0
      %v593 = vadd.f32 0.0, %v592
      %594 = vmatmul.f32.gmra.mxu0 %v552
      %v595 = vpop.f32.mrf.mxu0
      %v596 = vadd.f32 0.0, %v595
      %597 = vmatmul.f32.gmra.mxu0 %v555
      %v598 = vpop.f32.mrf.mxu0
      %v599 = vadd.f32 0.0, %v598
      %600 = vmatmul.f32.gmra.mxu0 %v558
      %v601 = vpop.f32.mrf.mxu0
      %v602 = vadd.f32 0.0, %v601
      %603 = vmatmul.f32.gmra.mxu0 %v561
      %v604 = vpop.f32.mrf.mxu0
      %v605 = vadd.f32 0.0, %v604
      %606 = vmatmul.f32.gmra.mxu0 %v564
      %v607 = vpop.f32.mrf.mxu0
      %v608 = vadd.f32 0.0, %v607
      %609 = vmatmul.f32.gmra.mxu0 %v567
      %v610 = vpop.f32.mrf.mxu0
      %v611 = vadd.f32 0.0, %v610
      %612 = vdwg.mxu0
      %v613 = vadd.f32 %v524, %v590
      %v614 = vadd.f32 %v525, %v593
      %v615 = vadd.f32 %v526, %v596
      %v616 = vadd.f32 %v527, %v599
      %v617 = vadd.f32 %v528, %v602
      %v618 = vadd.f32 %v529, %v605
      %v619 = vadd.f32 %v530, %v608
      %v620 = vadd.f32 %v531, %v611
      %v621 = vld [vmem:[%s445 + $0x1] sm:$0xff]
      %v622 = vld [vmem:[%s445 + $0x11] sm:$0xff]
      %v623 = vld [vmem:[%s445 + $0x21] sm:$0xff]
      %v624 = vld [vmem:[%s445 + $0x31] sm:$0xff]
      %v625 = vld [vmem:[%s445 + $0x41] sm:$0xff]
      %v626 = vld [vmem:[%s445 + $0x51] sm:$0xff]
      %v627 = vld [vmem:[%s445 + $0x61] sm:$0xff]
      %v628 = vld [vmem:[%s445 + $0x71] sm:$0xff]
      %s629 = scalar_lea.vmem %s1, 20
      %v630 = vld [vmem:[%s629] sm:$0xf]
      %v632 = vsel %vm219, %v621, 0
      %v635 = vsel %vm219, %v622, 0
      %v638 = vsel %vm219, %v623, 0
      %v641 = vsel %vm219, %v624, 0
      %v644 = vsel %vm219, %v625, 0
      %v647 = vsel %vm219, %v626, 0
      %v650 = vsel %vm219, %v627, 0
      %v653 = vsel %vm219, %v628, 0
      %v656 = vsel %vm244, %v630, 0
      %658 = vmatpush.msra.mxu0 0.0
      %659 = vmatpush.msra.mxu0 0.0
      %660 = vmatpush.msra.mxu0 0.0
      %661 = vmatpush.msra.mxu0 0.0
      %662 = vmatpush.msra.mxu0 0.0
      %663 = vmatpush.msra.mxu0 0.0
      %664 = vmatpush.msra.mxu0 0.0
      %665 = vmatpush.msra.mxu0 0.0
      %666 = vmatpush.msra.mxu0 0.0
      %667 = vmatpush.msra.mxu0 0.0
      %668 = vmatpush.msra.mxu0 0.0
      %669 = vmatpush.msra.mxu0 0.0
      %670 = vmatpush.msra.mxu0 0.0
      %671 = vmatpush.msra.mxu0 0.0
      %672 = vmatpush.msra.mxu0 0.0
      %673 = vmatpush.msra.mxu0 %v656
      %674 = vmatmul.f32.gmra.mxu0 %v632
      %v675 = vpop.f32.mrf.mxu0
      %v676 = vadd.f32 0.0, %v675
      %677 = vmatmul.f32.gmra.mxu0 %v635
      %v678 = vpop.f32.mrf.mxu0
      %v679 = vadd.f32 0.0, %v678
      %680 = vmatmul.f32.gmra.mxu0 %v638
      %v681 = vpop.f32.mrf.mxu0
      %v682 = vadd.f32 0.0, %v681
      %683 = vmatmul.f32.gmra.mxu0 %v641
      %v684 = vpop.f32.mrf.mxu0
      %v685 = vadd.f32 0.0, %v684
      %686 = vmatmul.f32.gmra.mxu0 %v644
      %v687 = vpop.f32.mrf.mxu0
      %v688 = vadd.f32 0.0, %v687
      %689 = vmatmul.f32.gmra.mxu0 %v647
      %v690 = vpop.f32.mrf.mxu0
      %v691 = vadd.f32 0.0, %v690
      %692 = vmatmul.f32.gmra.mxu0 %v650
      %v693 = vpop.f32.mrf.mxu0
      %v694 = vadd.f32 0.0, %v693
      %695 = vmatmul.f32.gmra.mxu0 %v653
      %v696 = vpop.f32.mrf.mxu0
      %v697 = vadd.f32 0.0, %v696
      %698 = vdwg.mxu0
      %v699 = vadd.f32 %v613, %v676
      %v700 = vadd.f32 %v614, %v679
      %v701 = vadd.f32 %v615, %v682
      %v702 = vadd.f32 %v616, %v685
      %v703 = vadd.f32 %v617, %v688
      %v704 = vadd.f32 %v618, %v691
      %v705 = vadd.f32 %v619, %v694
      %v706 = vadd.f32 %v620, %v697
      %s707 = sadd.s32 %s194, 1
      %s708 = smul.u32 %s707, 16
      %s709 = scalar_lea.vmem %s183, %s708
      %v710 = vld [vmem:[%s709] sm:$0xff]
      %v711 = vld [vmem:[%s709 + $0x10] sm:$0xff]
      %v712 = vld [vmem:[%s709 + $0x20] sm:$0xff]
      %v713 = vld [vmem:[%s709 + $0x30] sm:$0xff]
      %v714 = vld [vmem:[%s709 + $0x40] sm:$0xff]
      %v715 = vld [vmem:[%s709 + $0x50] sm:$0xff]
      %v716 = vld [vmem:[%s709 + $0x60] sm:$0xff]
      %v717 = vld [vmem:[%s709 + $0x70] sm:$0xff]
      %s718 = scalar_lea.vmem %s1, 24
      %v719 = vld [vmem:[%s718] sm:$0xf]
      %v721 = vsel %vm219, %v710, 0
      %v724 = vsel %vm219, %v711, 0
      %v727 = vsel %vm219, %v712, 0
      %v730 = vsel %vm219, %v713, 0
      %v733 = vsel %vm219, %v714, 0
      %v736 = vsel %vm219, %v715, 0
      %v739 = vsel %vm219, %v716, 0
      %v742 = vsel %vm219, %v717, 0
      %v745 = vsel %vm244, %v719, 0
      %747 = vmatpush.msra.mxu0 0.0
      %748 = vmatpush.msra.mxu0 0.0
      %749 = vmatpush.msra.mxu0 0.0
      %750 = vmatpush.msra.mxu0 0.0
      %751 = vmatpush.msra.mxu0 0.0
      %752 = vmatpush.msra.mxu0 0.0
      %753 = vmatpush.msra.mxu0 0.0
      %754 = vmatpush.msra.mxu0 0.0
      %755 = vmatpush.msra.mxu0 0.0
      %756 = vmatpush.msra.mxu0 0.0
      %757 = vmatpush.msra.mxu0 0.0
      %758 = vmatpush.msra.mxu0 0.0
      %759 = vmatpush.msra.mxu0 0.0
      %760 = vmatpush.msra.mxu0 0.0
      %761 = vmatpush.msra.mxu0 0.0
      %762 = vmatpush.msra.mxu0 %v745
      %763 = vmatmul.f32.gmra.mxu0 %v721
      %v764 = vpop.f32.mrf.mxu0
      %v765 = vadd.f32 0.0, %v764
      %766 = vmatmul.f32.gmra.mxu0 %v724
      %v767 = vpop.f32.mrf.mxu0
      %v768 = vadd.f32 0.0, %v767
      %769 = vmatmul.f32.gmra.mxu0 %v727
      %v770 = vpop.f32.mrf.mxu0
      %v771 = vadd.f32 0.0, %v770
      %772 = vmatmul.f32.gmra.mxu0 %v730
      %v773 = vpop.f32.mrf.mxu0
      %v774 = vadd.f32 0.0, %v773
      %775 = vmatmul.f32.gmra.mxu0 %v733
      %v776 = vpop.f32.mrf.mxu0
      %v777 = vadd.f32 0.0, %v776
      %778 = vmatmul.f32.gmra.mxu0 %v736
      %v779 = vpop.f32.mrf.mxu0
      %v780 = vadd.f32 0.0, %v779
      %781 = vmatmul.f32.gmra.mxu0 %v739
      %v782 = vpop.f32.mrf.mxu0
      %v783 = vadd.f32 0.0, %v782
      %784 = vmatmul.f32.gmra.mxu0 %v742
      %v785 = vpop.f32.mrf.mxu0
      %v786 = vadd.f32 0.0, %v785
      %787 = vdwg.mxu0
      %v788 = vadd.f32 %v699, %v765
      %v789 = vadd.f32 %v700, %v768
      %v790 = vadd.f32 %v701, %v771
      %v791 = vadd.f32 %v702, %v774
      %v792 = vadd.f32 %v703, %v777
      %v793 = vadd.f32 %v704, %v780
      %v794 = vadd.f32 %v705, %v783
      %v795 = vadd.f32 %v706, %v786
      %s796 = sadd.s32 %s194, 10
      %s797 = smul.u32 %s796, 16
      %s798 = scalar_lea.vmem %s183, %s797
      %v799 = vld [vmem:[%s798] sm:$0xff]
      %v800 = vld [vmem:[%s798 + $0x10] sm:$0xff]
      %v801 = vld [vmem:[%s798 + $0x20] sm:$0xff]
      %v802 = vld [vmem:[%s798 + $0x30] sm:$0xff]
      %v803 = vld [vmem:[%s798 + $0x40] sm:$0xff]
      %v804 = vld [vmem:[%s798 + $0x50] sm:$0xff]
      %v805 = vld [vmem:[%s798 + $0x60] sm:$0xff]
      %v806 = vld [vmem:[%s798 + $0x70] sm:$0xff]
      %s807 = scalar_lea.vmem %s1, 28
      %v808 = vld [vmem:[%s807] sm:$0xf]
      %v810 = vsel %vm219, %v799, 0
      %v813 = vsel %vm219, %v800, 0
      %v816 = vsel %vm219, %v801, 0
      %v819 = vsel %vm219, %v802, 0
      %v822 = vsel %vm219, %v803, 0
      %v825 = vsel %vm219, %v804, 0
      %v828 = vsel %vm219, %v805, 0
      %v831 = vsel %vm219, %v806, 0
      %v834 = vsel %vm244, %v808, 0
      %836 = vmatpush.msra.mxu0 0.0
      %837 = vmatpush.msra.mxu0 0.0
      %838 = vmatpush.msra.mxu0 0.0
      %839 = vmatpush.msra.mxu0 0.0
      %840 = vmatpush.msra.mxu0 0.0
      %841 = vmatpush.msra.mxu0 0.0
      %842 = vmatpush.msra.mxu0 0.0
      %843 = vmatpush.msra.mxu0 0.0
      %844 = vmatpush.msra.mxu0 0.0
      %845 = vmatpush.msra.mxu0 0.0
      %846 = vmatpush.msra.mxu0 0.0
      %847 = vmatpush.msra.mxu0 0.0
      %848 = vmatpush.msra.mxu0 0.0
      %849 = vmatpush.msra.mxu0 0.0
      %850 = vmatpush.msra.mxu0 0.0
      %851 = vmatpush.msra.mxu0 %v834
      %852 = vmatmul.f32.gmra.mxu0 %v810
      %v853 = vpop.f32.mrf.mxu0
      %v854 = vadd.f32 0.0, %v853
      %855 = vmatmul.f32.gmra.mxu0 %v813
      %v856 = vpop.f32.mrf.mxu0
      %v857 = vadd.f32 0.0, %v856
      %858 = vmatmul.f32.gmra.mxu0 %v816
      %v859 = vpop.f32.mrf.mxu0
      %v860 = vadd.f32 0.0, %v859
      %861 = vmatmul.f32.gmra.mxu0 %v819
      %v862 = vpop.f32.mrf.mxu0
      %v863 = vadd.f32 0.0, %v862
      %864 = vmatmul.f32.gmra.mxu0 %v822
      %v865 = vpop.f32.mrf.mxu0
      %v866 = vadd.f32 0.0, %v865
      %867 = vmatmul.f32.gmra.mxu0 %v825
      %v868 = vpop.f32.mrf.mxu0
      %v869 = vadd.f32 0.0, %v868
      %870 = vmatmul.f32.gmra.mxu0 %v828
      %v871 = vpop.f32.mrf.mxu0
      %v872 = vadd.f32 0.0, %v871
      %873 = vmatmul.f32.gmra.mxu0 %v831
      %v874 = vpop.f32.mrf.mxu0
      %v875 = vadd.f32 0.0, %v874
      %876 = vdwg.mxu0
      %v877 = vadd.f32 %v788, %v854
      %v878 = vadd.f32 %v789, %v857
      %v879 = vadd.f32 %v790, %v860
      %v880 = vadd.f32 %v791, %v863
      %v881 = vadd.f32 %v792, %v866
      %v882 = vadd.f32 %v793, %v869
      %v883 = vadd.f32 %v794, %v872
      %v884 = vadd.f32 %v795, %v875
      %v885 = vld [vmem:[%s709 + $0x1] sm:$0xff]
      %v886 = vld [vmem:[%s709 + $0x11] sm:$0xff]
      %v887 = vld [vmem:[%s709 + $0x21] sm:$0xff]
      %v888 = vld [vmem:[%s709 + $0x31] sm:$0xff]
      %v889 = vld [vmem:[%s709 + $0x41] sm:$0xff]
      %v890 = vld [vmem:[%s709 + $0x51] sm:$0xff]
      %v891 = vld [vmem:[%s709 + $0x61] sm:$0xff]
      %v892 = vld [vmem:[%s709 + $0x71] sm:$0xff]
      %s893 = scalar_lea.vmem %s1, 32
      %v894 = vld [vmem:[%s893] sm:$0xf]
      %v896 = vsel %vm219, %v885, 0
      %v899 = vsel %vm219, %v886, 0
      %v902 = vsel %vm219, %v887, 0
      %v905 = vsel %vm219, %v888, 0
      %v908 = vsel %vm219, %v889, 0
      %v911 = vsel %vm219, %v890, 0
      %v914 = vsel %vm219, %v891, 0
      %v917 = vsel %vm219, %v892, 0
      %v920 = vsel %vm244, %v894, 0
      %922 = vmatpush.msra.mxu0 0.0
      %923 = vmatpush.msra.mxu0 0.0
      %924 = vmatpush.msra.mxu0 0.0
      %925 = vmatpush.msra.mxu0 0.0
      %926 = vmatpush.msra.mxu0 0.0
      %927 = vmatpush.msra.mxu0 0.0
      %928 = vmatpush.msra.mxu0 0.0
      %929 = vmatpush.msra.mxu0 0.0
      %930 = vmatpush.msra.mxu0 0.0
      %931 = vmatpush.msra.mxu0 0.0
      %932 = vmatpush.msra.mxu0 0.0
      %933 = vmatpush.msra.mxu0 0.0
      %934 = vmatpush.msra.mxu0 0.0
      %935 = vmatpush.msra.mxu0 0.0
      %936 = vmatpush.msra.mxu0 0.0
      %937 = vmatpush.msra.mxu0 %v920
      %938 = vmatmul.f32.gmra.mxu0 %v896
      %v939 = vpop.f32.mrf.mxu0
      %v940 = vadd.f32 0.0, %v939
      %941 = vmatmul.f32.gmra.mxu0 %v899
      %v942 = vpop.f32.mrf.mxu0
      %v943 = vadd.f32 0.0, %v942
      %944 = vmatmul.f32.gmra.mxu0 %v902
      %v945 = vpop.f32.mrf.mxu0
      %v946 = vadd.f32 0.0, %v945
      %947 = vmatmul.f32.gmra.mxu0 %v905
      %v948 = vpop.f32.mrf.mxu0
      %v949 = vadd.f32 0.0, %v948
      %950 = vmatmul.f32.gmra.mxu0 %v908
      %v951 = vpop.f32.mrf.mxu0
      %v952 = vadd.f32 0.0, %v951
      %953 = vmatmul.f32.gmra.mxu0 %v911
      %v954 = vpop.f32.mrf.mxu0
      %v955 = vadd.f32 0.0, %v954
      %956 = vmatmul.f32.gmra.mxu0 %v914
      %v957 = vpop.f32.mrf.mxu0
      %v958 = vadd.f32 0.0, %v957
      %959 = vmatmul.f32.gmra.mxu0 %v917
      %v960 = vpop.f32.mrf.mxu0
      %v961 = vadd.f32 0.0, %v960
      %962 = vdwg.mxu0
      %v963 = vadd.f32 %v877, %v940
      %v964 = vadd.f32 %v878, %v943
      %v965 = vadd.f32 %v879, %v946
      %v966 = vadd.f32 %v880, %v949
      %v967 = vadd.f32 %v881, %v952
      %v968 = vadd.f32 %v882, %v955
      %v969 = vadd.f32 %v883, %v958
      %v970 = vadd.f32 %v884, %v961
      %v971 = vld [vmem:[%s2] sm:$0x1]
      %v973 = vperm.slane %v971, 0
      %v975 = vadd.f32 %v963, %v973
      %v976 = vadd.f32 %v964, %v973
      %v977 = vadd.f32 %v965, %v973
      %v978 = vadd.f32 %v966, %v973
      %v979 = vadd.f32 %v967, %v973
      %v980 = vadd.f32 %v968, %v973
      %v981 = vadd.f32 %v969, %v973
      %v982 = vadd.f32 %v970, %v973
      %983 = vst [vmem:[%s192] sm:$0xff] %v975
      %984 = vst [vmem:[%s192 + $0x8] sm:$0xff] %v976
      %985 = vst [vmem:[%s192 + $0x10] sm:$0xff] %v977
      %986 = vst [vmem:[%s192 + $0x18] sm:$0xff] %v978
      %987 = vst [vmem:[%s192 + $0x20] sm:$0xff] %v979
      %988 = vst [vmem:[%s192 + $0x28] sm:$0xff] %v980
      %989 = vst [vmem:[%s192 + $0x30] sm:$0xff] %v981
      %990 = vst [vmem:[%s192 + $0x38] sm:$0xff] %v982
      %s991 = smul.u32 8, %s19
      %p992 = scmp.lt.s32.totalorder %s18, 1
      %s993 = scalar_select %p992, %s18, 1
      %p994 = scmp.lt.s32.totalorder %s991, 7
      %s995 = scalar_select %p994, %s991, 7
      %s996 = smul.addr %s993, 8
      %s997 = sadd.s32 %s995, %s996
      %s998 = smul.addr %s997, 8
      %s999 = scalar_lea.vmem %s3, %s998
      // Predicated region
      $region33: #{depthwise_conv2d.1} parent=31 // pred_check
        %p1000 = pneg %p114
      $region34: #{depthwise_conv2d.1} parent=31 // pred_check_branch
        %1002 = sbr.rel (%p1000) target = $region36
      $region35: #{depthwise_conv2d.1} parent=31 // pred_region
        %s1003 = smul.u32 8, %s19
      $region36: #{depthwise_conv2d.1} parent=31 // pred_fallthru
        _
    $region32: #{depthwise_conv2d.1} parent=5 // pred_fallthru
      _
    %p1004 = scmp.le.s32.totalorder 2, %s9
    // Predicated region
    $region37: #{depthwise_conv2d.1} parent=5 // pred_check
      %p1005 = pneg %p1004
    $region38: #{depthwise_conv2d.1} parent=5 // pred_check_branch
      %1007 = sbr.rel (%p1005) target = $region40
    $region39: #{depthwise_conv2d.1} parent=5 // pred_region
      %s1008 = ssub.s32 %s9, 2
      // Predicated region
      $region41: #{depthwise_conv2d.1} parent=39 // pred_check
        %p1009 = pneg %p120
      $region42: #{depthwise_conv2d.1} parent=39 // pred_check_branch
        %1011 = sbr.rel (%p1009) target = $region44
      $region43: #{depthwise_conv2d.1} parent=39 // pred_region
        %s1012 = smul.u32 8, %s21
        %p1013 = scmp.lt.s32.totalorder %s20, 1
        %s1014 = scalar_select %p1013, %s20, 1
        %p1015 = scmp.lt.s32.totalorder %s1012, 7
        %s1016 = scalar_select %p1015, %s1012, 7
        %s1017 = smul.addr %s1014, 8
        %s1018 = sadd.s32 %s1016, %s1017
        %s1019 = smul.addr %s1018, 8
        %s1020 = scalar_lea.vmem %s3, %s1019
      $region44: #{depthwise_conv2d.1} parent=39 // pred_fallthru
        _
    $region40: #{depthwise_conv2d.1} parent=5 // pred_fallthru
      _
  $region6: #{depthwise_conv2d.1} parent=0 // loop_footer
    %s13 = sadd.s32 1, %s9
  $region7: #{depthwise_conv2d.1} parent=0 // loop_footer_branch
    %8 = sbr.rel target = $region3
  $region8: #{depthwise_conv2d.1} parent=0 // loop_exit
    _

</llo_original>
